<compile_context>
chip_gen: v5e
topology: v5e:2x2
jax: 0.10.0
libtpu: 0.0.40
codegen_flags: <defaults>
</compile_context>

<pallas_src>
import functools

import jax
import jax.numpy as jnp
from jax.experimental import pallas as pl
from jax.experimental.pallas import tpu as pltpu


# ----------------------------------------------------------------------------
# Pallas kernel: fused 3x3 depthwise conv + per-channel bias (everything folded)
# ----------------------------------------------------------------------------
def _repdw_kernel(x_ref, wb_ref, o_ref, xpad_ref,
                  *, ks, pad, stride, h_out, w_out):
    # x_ref:    (1, Cb, H, W)            input channel-block (NCHW, unpadded)
    # wb_ref:   (Cb, ks*ks+1, W_out)     rows 0..ks*ks-1: folded tap weights,
    #                                    row ks*ks: folded bias (both pre-broadcast
    #                                    along W_out)
    # o_ref:    (1, Cb, H_out, W_out)
    # xpad_ref: (Cb, H+2p, W+2p) f32     VMEM scratch holding the zero-padded tile
    cb, hp, wp = xpad_ref.shape
    h_in, w_in = hp - 2 * pad, wp - 2 * pad

    # Build the zero-padded tile in VMEM (padding done in-kernel -> no extra HBM
    # pass in the wrapper).  Border is re-zeroed every grid step: it is tiny and
    # keeps the kernel correct when the parallel grid is sharded across cores.
    if pad > 0:
        zrow = jnp.zeros((cb, pad, wp), jnp.float32)
        zcol = jnp.zeros((cb, h_in, pad), jnp.float32)
        xpad_ref[:, :pad, :] = zrow
        xpad_ref[:, pad + h_in:, :] = zrow
        xpad_ref[:, pad:pad + h_in, :pad] = zcol
        xpad_ref[:, pad:pad + h_in, pad + w_in:] = zcol
    xpad_ref[:, pad:pad + h_in, pad:pad + w_in] = x_ref[0].astype(jnp.float32)

    # Start the accumulator from the packed (pre-broadcast) bias row: epilogue
    # is then just a cast.
    acc = jnp.broadcast_to(wb_ref[:, ks * ks:ks * ks + 1, :], (cb, h_out, w_out))

    h_span = (h_out - 1) * stride + 1
    w_span = (w_out - 1) * stride + 1
    for kh in range(ks):                       # static unrolled taps (ks = 3)
        for kw in range(ks):
            # Ref slices (static offsets) -> clean VMEM loads, no value-level
            # shifted copies of the whole padded tile.
            window = xpad_ref[:, kh:kh + h_span, kw:kw + w_span]
            if stride > 1:
                # TODO(synk): stride>1 falls back to a value-level strided slice.
                window = window[:, ::stride, ::stride]
            tap = kh * ks + kw
            # Per-tap weight row loaded on demand (keeps vreg pressure low; the
            # rows are distinct data so there is nothing redundant to hoist).
            wtap = wb_ref[:, tap:tap + 1, :]               # (Cb, 1, W_out)
            acc = acc + window * wtap
    o_ref[0] = acc.astype(o_ref.dtype)


def _pick_channel_block(c, h, w, h_out, w_out, ks, pad, itemsize,
                        budget=28 * 1024 * 1024):
    """Largest channel block Cb (divisor of C, multiple of 8 or == C) whose
    double-buffered working set fits the VMEM budget (v7x-safe)."""
    def padded(rows, cols, isz):           # (8,128) tile padding of last two dims
        return (-(-rows // 8) * 8) * (-(-cols // 128) * 128) * isz

    def vmem_bytes(cb):
        return (2 * cb * padded(h, w, itemsize)                      # input (x2 buf)
                + cb * padded(h + 2 * pad, w + 2 * pad, 4)           # f32 scratch
                + 2 * cb * padded(h_out, w_out, itemsize)            # output (x2 buf)
                + 2 * cb * padded(ks * ks + 1, w_out, 4))            # packed weights+bias

    fallback = c
    for cb in range(c, 0, -1):
        if c % cb:
            continue
        if cb != c and cb % 8:
            continue
        fallback = cb
        if vmem_bytes(cb) <= budget:
            return cb
    return fallback


def repdw_pallas(x, w_eff, b_eff, *, ks=3, pad=1, stride=1):
    """x: (N, C, H, W) NCHW.  w_eff: (C, ks, ks) folded DW weights (outer-BN scale
    included).  b_eff: (C,) folded bias.  Returns (N, C, H_out, W_out) in x.dtype."""
    n, c, h, w = x.shape
    assert w_eff.shape == (c, ks, ks) and b_eff.shape == (c,)
    h_out = (h + 2 * pad - ks) // stride + 1
    w_out = (w + 2 * pad - ks) // stride + 1

    cb = _pick_channel_block(c, h, w, h_out, w_out, ks, pad, x.dtype.itemsize)

    # Pack folded weights + bias into one array and pre-broadcast along W_out
    # (tiny: (ks*ks+1)*C*W_out floats) so the in-kernel tap math is a plain
    # sublane broadcast against a lane-resident row, and there is a single
    # weight DMA stream.
    wb = jnp.concatenate(
        [w_eff.astype(jnp.float32).reshape(c, ks * ks, 1),
         b_eff.astype(jnp.float32).reshape(c, 1, 1)], axis=1)       # (C, ks*ks+1, 1)
    wb = jnp.broadcast_to(wb, (c, ks * ks + 1, w_out))

    kernel = functools.partial(_repdw_kernel, ks=ks, pad=pad, stride=stride,
                               h_out=h_out, w_out=w_out)

    # Grid: channel-blocks outer, batch inner.  The weight block index depends
    # only on the outer axis, so it stays resident across the inner (batch)
    # loop and the pipeline skips its HBM re-fetch.
    return pl.pallas_call(
        kernel,
        out_shape=jax.ShapeDtypeStruct((n, c, h_out, w_out), x.dtype),
        grid=(c // cb, n),
        in_specs=[
            pl.BlockSpec((1, cb, h, w), lambda j, i: (i, j, 0, 0)),
            pl.BlockSpec((cb, ks * ks + 1, w_out), lambda j, i: (j, 0, 0)),
        ],
        out_specs=pl.BlockSpec((1, cb, h_out, w_out), lambda j, i: (i, j, 0, 0)),
        scratch_shapes=[pltpu.VMEM((cb, h + 2 * pad, w + 2 * pad), jnp.float32)],
        compiler_params=pltpu.CompilerParams(
            dimension_semantics=("parallel", "parallel"),
            vmem_limit_bytes=48 * 1024 * 1024,
        ),
    )(x, wb)


# ----------------------------------------------------------------------------
# Module: deterministic synthetic parameters + folding (glue, plain JAX)
# ----------------------------------------------------------------------------
class RepDWPallas:
    """Eval-mode re-implementation of RepDW with synthetic (deterministic) params."""

    def __init__(self, ed, stride, key):
        self.ch, self.stride = ed, stride
        self.ks, self.pad = 3, 1
        self.use_res_connect = stride == 1   # defined (like the module) but unused in forward
        self.eps = eps = 1e-5
        c = ed
        keys = jax.random.split(key, 7)

        def bn_params(k):
            k0, k1, k2, k3 = jax.random.split(k, 4)
            gamma = 1.0 + 0.1 * jax.random.normal(k0, (c,), jnp.float32)
            beta = 0.1 * jax.random.normal(k1, (c,), jnp.float32)
            mean = 0.1 * jax.random.normal(k2, (c,), jnp.float32)
            var = 0.5 + jnp.abs(jax.random.normal(k3, (c,), jnp.float32))
            return gamma, beta, mean, var

        # conv / conv1: 3x3 depthwise (no bias) + BN.  conv2: 1x1 depthwise with bias.
        self.w0 = 0.3 * jax.random.normal(keys[0], (c, 3, 3), jnp.float32)
        self.w1 = 0.3 * jax.random.normal(keys[1], (c, 3, 3), jnp.float32)
        self.w2 = 0.3 * jax.random.normal(keys[2], (c, 1, 1), jnp.float32)
        self.b2 = 0.1 * jax.random.normal(keys[3], (c,), jnp.float32)
        self.bn0 = bn_params(keys[4])
        self.bn1 = bn_params(keys[5])
        self.bno = bn_params(keys[6])

        # ---- fold (same algebra as RepDW.fuse / Conv2d_BN_fusion.fuse) ----
        def fold_conv_bn(wt, bn_p):
            g, b, m, v = bn_p
            s = g / jnp.sqrt(v + eps)
            return wt * s[:, None, None], b - m * s

        wf0, bf0 = fold_conv_bn(self.w0, self.bn0)
        wf1, bf1 = fold_conv_bn(self.w1, self.bn1)
        # 1x1 conv zero-padded to the 3x3 centre (pad=1 vs pad=0 keeps outputs aligned).
        wf2 = jnp.zeros((c, 3, 3), jnp.float32).at[:, 1, 1].set(self.w2[:, 0, 0])
        w_sum = wf0 + wf1 + wf2
        b_sum = bf0 + bf1 + self.b2

        go, bo, mo, vo = self.bno
        so = go / jnp.sqrt(vo + eps)
        self.w_eff = w_sum * so[:, None, None]      # outer-BN scale folded into weights
        self.b_eff = bo + (b_sum - mo) * so         # single per-channel bias

    def __call__(self, x_nchw):
        return repdw_pallas(x_nchw, self.w_eff, self.b_eff,
                            ks=self.ks, pad=self.pad, stride=self.stride)

    # Pure-JAX *unfused* eval-mode forward (validates fold algebra + kernel).
    def reference(self, x):
        c, eps = self.ch, self.eps
        hi = jax.lax.Precision.HIGHEST

        def dwconv(inp, wt, pad):
            return jax.lax.conv_general_dilated(
                inp, wt, window_strides=(self.stride, self.stride),
                padding=[(pad, pad), (pad, pad)],
                dimension_numbers=("NCHW", "OIHW", "NCHW"),
                feature_group_count=c, precision=hi)

        def bn(y, params):
            g, b, m, v = params
            s = (g / jnp.sqrt(v + eps)).reshape(1, c, 1, 1)
            return (y - m.reshape(1, c, 1, 1)) * s + b.reshape(1, c, 1, 1)

        y0 = bn(dwconv(x, self.w0[:, None, :, :], 1), self.bn0)
        y1 = bn(dwconv(x, self.w1[:, None, :, :], 1), self.bn1)
        y2 = dwconv(x, self.w2[:, None, :, :], 0) + self.b2.reshape(1, c, 1, 1)
        return bn(y0 + y1 + y2, self.bno)


if __name__ == "__main__":
    key = jax.random.PRNGKey(0)
    k_x, k_p = jax.random.split(key)

    # Small shapes consistent with the module (depthwise, ks=3, pad=1, stride=1).
    N, C, H, W = 2, 4, 16, 16
    stride = 1

    mod = RepDWPallas(ed=C, stride=stride, key=k_p)
    x = jax.random.normal(k_x, (N, C, H, W), jnp.float32)

    y = jax.block_until_ready(mod(x))

    y_ref = jax.block_until_ready(mod.reference(x))   # unfused eval-mode forward
    assert y.shape == y_ref.shape == (N, C, H, W)
    err = float(jnp.max(jnp.abs(y - y_ref)))
    assert jnp.allclose(y, y_ref, rtol=1e-4, atol=1e-4), f"mismatch vs reference: {err}"

    print("KERNEL_OK")
</pallas_src>

<mosaic_0001>
module attributes {stable_mosaic.version = 11 : i64} {
  func.func @_repdw_kernel(%arg0: i32, %arg1: i32, %arg2: memref<1x4x16x16xf32, #tpu.memory_space<vmem>>, %arg3: memref<4x10x16xf32, #tpu.memory_space<vmem>>, %arg4: memref<1x4x16x16xf32, #tpu.memory_space<vmem>>, %arg5: memref<4x18x18xf32, #tpu.memory_space<vmem>>) attributes {dimension_semantics = [#tpu.dimension_semantics<parallel>, #tpu.dimension_semantics<parallel>], iteration_bounds = array<i64: 1, 2>, scalar_prefetch = 0 : i64, scratch_operands = 1 : i64, tpu.core_type = #tpu.core_type<tc>, window_params = [{transform_indices = @transform_0, window_bounds = array<i64: 1, 4, 16, 16>}, {transform_indices = @transform_1, window_bounds = array<i64: 4, 10, 16>}, {transform_indices = @transform_2, window_bounds = array<i64: 1, 4, 16, 16>}]} {
    %cst = arith.constant 0.000000e+00 : f32
    %0 = vector.broadcast %cst : f32 to vector<4x1x18xf32>
    %cst_0 = arith.constant 0.000000e+00 : f32
    %1 = vector.broadcast %cst_0 : f32 to vector<4x16x1xf32>
    %c0 = arith.constant 0 : index
    %c0_1 = arith.constant 0 : index
    %c0_2 = arith.constant 0 : index
    %2 = vector.load %arg5[%c0, %c0_1, %c0_2] : memref<4x18x18xf32, #tpu.memory_space<vmem>>, vector<4x1x18xf32>
    tpu.vector_store %arg5[%c0, %c0_1, %c0_2], %0 {strides = array<i32>} : memref<4x18x18xf32, #tpu.memory_space<vmem>>, vector<4x1x18xf32>,
    %c0_3 = arith.constant 0 : index
    %c17 = arith.constant 17 : index
    %c0_4 = arith.constant 0 : index
    %3 = vector.load %arg5[%c0_3, %c17, %c0_4] : memref<4x18x18xf32, #tpu.memory_space<vmem>>, vector<4x1x18xf32>
    tpu.vector_store %arg5[%c0_3, %c17, %c0_4], %0 {strides = array<i32>} : memref<4x18x18xf32, #tpu.memory_space<vmem>>, vector<4x1x18xf32>,
    %c0_5 = arith.constant 0 : index
    %c1 = arith.constant 1 : index
    %c0_6 = arith.constant 0 : index
    %4 = vector.load %arg5[%c0_5, %c1, %c0_6] : memref<4x18x18xf32, #tpu.memory_space<vmem>>, vector<4x16x1xf32>
    tpu.vector_store %arg5[%c0_5, %c1, %c0_6], %1 {strides = array<i32>} : memref<4x18x18xf32, #tpu.memory_space<vmem>>, vector<4x16x1xf32>,
    %c0_7 = arith.constant 0 : index
    %c1_8 = arith.constant 1 : index
    %c17_9 = arith.constant 17 : index
    %5 = vector.load %arg5[%c0_7, %c1_8, %c17_9] : memref<4x18x18xf32, #tpu.memory_space<vmem>>, vector<4x16x1xf32>
    tpu.vector_store %arg5[%c0_7, %c1_8, %c17_9], %1 {strides = array<i32>} : memref<4x18x18xf32, #tpu.memory_space<vmem>>, vector<4x16x1xf32>,
    %c0_10 = arith.constant 0 : index
    %c0_11 = arith.constant 0 : index
    %c0_12 = arith.constant 0 : index
    %c0_13 = arith.constant 0 : index
    %6 = vector.load %arg2[%c0_10, %c0_11, %c0_12, %c0_13] : memref<1x4x16x16xf32, #tpu.memory_space<vmem>>, vector<1x4x16x16xf32>
    %7 = vector.shape_cast %6 : vector<1x4x16x16xf32> to vector<4x16x16xf32>
    %c0_14 = arith.constant 0 : index
    %c1_15 = arith.constant 1 : index
    %c1_16 = arith.constant 1 : index
    %8 = vector.load %arg5[%c0_14, %c1_15, %c1_16] : memref<4x18x18xf32, #tpu.memory_space<vmem>>, vector<4x16x16xf32>
    tpu.vector_store %arg5[%c0_14, %c1_15, %c1_16], %7 {strides = array<i32>} : memref<4x18x18xf32, #tpu.memory_space<vmem>>, vector<4x16x16xf32>,
    %c0_17 = arith.constant 0 : index
    %c9 = arith.constant 9 : index
    %c0_18 = arith.constant 0 : index
    %9 = vector.load %arg3[%c0_17, %c9, %c0_18] : memref<4x10x16xf32, #tpu.memory_space<vmem>>, vector<4x1x16xf32>
    %10 = vector.shape_cast %9 : vector<4x1x16xf32> to vector<4x1x16xf32>
    %11 = vector.broadcast %10 : vector<4x1x16xf32> to vector<4x16x16xf32>
    %c0_19 = arith.constant 0 : index
    %c0_20 = arith.constant 0 : index
    %c0_21 = arith.constant 0 : index
    %12 = vector.load %arg5[%c0_19, %c0_20, %c0_21] : memref<4x18x18xf32, #tpu.memory_space<vmem>>, vector<4x16x16xf32>
    %c0_22 = arith.constant 0 : index
    %c0_23 = arith.constant 0 : index
    %c0_24 = arith.constant 0 : index
    %13 = vector.load %arg3[%c0_22, %c0_23, %c0_24] : memref<4x10x16xf32, #tpu.memory_space<vmem>>, vector<4x1x16xf32>
    %14 = vector.broadcast %13 : vector<4x1x16xf32> to vector<4x16x16xf32>
    %15 = arith.mulf %12, %14 : vector<4x16x16xf32>
    %16 = arith.addf %11, %15 : vector<4x16x16xf32>
    %c0_25 = arith.constant 0 : index
    %c0_26 = arith.constant 0 : index
    %c1_27 = arith.constant 1 : index
    %17 = vector.load %arg5[%c0_25, %c0_26, %c1_27] : memref<4x18x18xf32, #tpu.memory_space<vmem>>, vector<4x16x16xf32>
    %c0_28 = arith.constant 0 : index
    %c1_29 = arith.constant 1 : index
    %c0_30 = arith.constant 0 : index
    %18 = vector.load %arg3[%c0_28, %c1_29, %c0_30] : memref<4x10x16xf32, #tpu.memory_space<vmem>>, vector<4x1x16xf32>
    %19 = vector.broadcast %18 : vector<4x1x16xf32> to vector<4x16x16xf32>
    %20 = arith.mulf %17, %19 : vector<4x16x16xf32>
    %21 = arith.addf %16, %20 : vector<4x16x16xf32>
    %c0_31 = arith.constant 0 : index
    %c0_32 = arith.constant 0 : index
    %c2 = arith.constant 2 : index
    %22 = vector.load %arg5[%c0_31, %c0_32, %c2] : memref<4x18x18xf32, #tpu.memory_space<vmem>>, vector<4x16x16xf32>
    %c0_33 = arith.constant 0 : index
    %c2_34 = arith.constant 2 : index
    %c0_35 = arith.constant 0 : index
    %23 = vector.load %arg3[%c0_33, %c2_34, %c0_35] : memref<4x10x16xf32, #tpu.memory_space<vmem>>, vector<4x1x16xf32>
    %24 = vector.broadcast %23 : vector<4x1x16xf32> to vector<4x16x16xf32>
    %25 = arith.mulf %22, %24 : vector<4x16x16xf32>
    %26 = arith.addf %21, %25 : vector<4x16x16xf32>
    %c0_36 = arith.constant 0 : index
    %c1_37 = arith.constant 1 : index
    %c0_38 = arith.constant 0 : index
    %27 = vector.load %arg5[%c0_36, %c1_37, %c0_38] : memref<4x18x18xf32, #tpu.memory_space<vmem>>, vector<4x16x16xf32>
    %c0_39 = arith.constant 0 : index
    %c3 = arith.constant 3 : index
    %c0_40 = arith.constant 0 : index
    %28 = vector.load %arg3[%c0_39, %c3, %c0_40] : memref<4x10x16xf32, #tpu.memory_space<vmem>>, vector<4x1x16xf32>
    %29 = vector.broadcast %28 : vector<4x1x16xf32> to vector<4x16x16xf32>
    %30 = arith.mulf %27, %29 : vector<4x16x16xf32>
    %31 = arith.addf %26, %30 : vector<4x16x16xf32>
    %c0_41 = arith.constant 0 : index
    %c1_42 = arith.constant 1 : index
    %c1_43 = arith.constant 1 : index
    %32 = vector.load %arg5[%c0_41, %c1_42, %c1_43] : memref<4x18x18xf32, #tpu.memory_space<vmem>>, vector<4x16x16xf32>
    %c0_44 = arith.constant 0 : index
    %c4 = arith.constant 4 : index
    %c0_45 = arith.constant 0 : index
    %33 = vector.load %arg3[%c0_44, %c4, %c0_45] : memref<4x10x16xf32, #tpu.memory_space<vmem>>, vector<4x1x16xf32>
    %34 = vector.broadcast %33 : vector<4x1x16xf32> to vector<4x16x16xf32>
    %35 = arith.mulf %32, %34 : vector<4x16x16xf32>
    %36 = arith.addf %31, %35 : vector<4x16x16xf32>
    %c0_46 = arith.constant 0 : index
    %c1_47 = arith.constant 1 : index
    %c2_48 = arith.constant 2 : index
    %37 = vector.load %arg5[%c0_46, %c1_47, %c2_48] : memref<4x18x18xf32, #tpu.memory_space<vmem>>, vector<4x16x16xf32>
    %c0_49 = arith.constant 0 : index
    %c5 = arith.constant 5 : index
    %c0_50 = arith.constant 0 : index
    %38 = vector.load %arg3[%c0_49, %c5, %c0_50] : memref<4x10x16xf32, #tpu.memory_space<vmem>>, vector<4x1x16xf32>
    %39 = vector.broadcast %38 : vector<4x1x16xf32> to vector<4x16x16xf32>
    %40 = arith.mulf %37, %39 : vector<4x16x16xf32>
    %41 = arith.addf %36, %40 : vector<4x16x16xf32>
    %c0_51 = arith.constant 0 : index
    %c2_52 = arith.constant 2 : index
    %c0_53 = arith.constant 0 : index
    %42 = vector.load %arg5[%c0_51, %c2_52, %c0_53] : memref<4x18x18xf32, #tpu.memory_space<vmem>>, vector<4x16x16xf32>
    %c0_54 = arith.constant 0 : index
    %c6 = arith.constant 6 : index
    %c0_55 = arith.constant 0 : index
    %43 = vector.load %arg3[%c0_54, %c6, %c0_55] : memref<4x10x16xf32, #tpu.memory_space<vmem>>, vector<4x1x16xf32>
    %44 = vector.broadcast %43 : vector<4x1x16xf32> to vector<4x16x16xf32>
    %45 = arith.mulf %42, %44 : vector<4x16x16xf32>
    %46 = arith.addf %41, %45 : vector<4x16x16xf32>
    %c0_56 = arith.constant 0 : index
    %c2_57 = arith.constant 2 : index
    %c1_58 = arith.constant 1 : index
    %47 = vector.load %arg5[%c0_56, %c2_57, %c1_58] : memref<4x18x18xf32, #tpu.memory_space<vmem>>, vector<4x16x16xf32>
    %c0_59 = arith.constant 0 : index
    %c7 = arith.constant 7 : index
    %c0_60 = arith.constant 0 : index
    %48 = vector.load %arg3[%c0_59, %c7, %c0_60] : memref<4x10x16xf32, #tpu.memory_space<vmem>>, vector<4x1x16xf32>
    %49 = vector.broadcast %48 : vector<4x1x16xf32> to vector<4x16x16xf32>
    %50 = arith.mulf %47, %49 : vector<4x16x16xf32>
    %51 = arith.addf %46, %50 : vector<4x16x16xf32>
    %c0_61 = arith.constant 0 : index
    %c2_62 = arith.constant 2 : index
    %c2_63 = arith.constant 2 : index
    %52 = vector.load %arg5[%c0_61, %c2_62, %c2_63] : memref<4x18x18xf32, #tpu.memory_space<vmem>>, vector<4x16x16xf32>
    %c0_64 = arith.constant 0 : index
    %c8 = arith.constant 8 : index
    %c0_65 = arith.constant 0 : index
    %53 = vector.load %arg3[%c0_64, %c8, %c0_65] : memref<4x10x16xf32, #tpu.memory_space<vmem>>, vector<4x1x16xf32>
    %54 = vector.broadcast %53 : vector<4x1x16xf32> to vector<4x16x16xf32>
    %55 = arith.mulf %52, %54 : vector<4x16x16xf32>
    %56 = arith.addf %51, %55 : vector<4x16x16xf32>
    %c0_66 = arith.constant 0 : index
    %c0_67 = arith.constant 0 : index
    %c0_68 = arith.constant 0 : index
    %c0_69 = arith.constant 0 : index
    %57 = vector.load %arg4[%c0_66, %c0_67, %c0_68, %c0_69] : memref<1x4x16x16xf32, #tpu.memory_space<vmem>>, vector<1x4x16x16xf32>
    %58 = vector.shape_cast %57 : vector<1x4x16x16xf32> to vector<4x16x16xf32>
    %59 = vector.shape_cast %56 : vector<4x16x16xf32> to vector<1x4x16x16xf32>
    tpu.vector_store %arg4[%c0_66, %c0_67, %c0_68, %c0_69], %59 {strides = array<i32>} : memref<1x4x16x16xf32, #tpu.memory_space<vmem>>, vector<1x4x16x16xf32>,
    return
  }
  func.func @transform_0(%arg0: i32, %arg1: i32) -> (i32, i32, i32, i32) {
    %c0_i32 = arith.constant 0 : i32
    %c0_i32_0 = arith.constant 0 : i32
    %c0_i32_1 = arith.constant 0 : i32
    return %arg1, %arg0, %c0_i32, %c0_i32_0 : i32, i32, i32, i32
  }
  func.func @transform_1(%arg0: i32, %arg1: i32) -> (i32, i32, i32) {
    %c0_i32 = arith.constant 0 : i32
    %c0_i32_0 = arith.constant 0 : i32
    %c0_i32_1 = arith.constant 0 : i32
    return %arg0, %c0_i32, %c0_i32_0 : i32, i32, i32
  }
  func.func @transform_2(%arg0: i32, %arg1: i32) -> (i32, i32, i32, i32) {
    %c0_i32 = arith.constant 0 : i32
    %c0_i32_0 = arith.constant 0 : i32
    %c0_i32_1 = arith.constant 0 : i32
    return %arg1, %arg0, %c0_i32, %c0_i32_0 : i32, i32, i32, i32
  }
}

</mosaic_0001>

<llo_original>
// kernel: tpu_custom_call.1
$region0: #{tpu_custom_call.1}
  #allocation0 [shape = 'u32[]', space=smem, size = 0x4, offset = 0x4, fixed_abs, tag = 'smem constant byte address 0x4 - core index']
  #allocation1 [shape = 'u32[72,128]{1,0:T(1,128)}', space=vmem, size = 0x9000, scoped, tag = 'internal scratch']
  #allocation2 [shape = 'f32[4,18,18]{2,1,0:T(8,128)}', space=vmem, size = 0xc000, scoped, tag = 'scratch operand']
  %s0 = inlined_call_operand.hbm [shape: f32[2,4,16,16], index: 0, kind: input, shape index: {}]
  %s1 = inlined_call_operand.vmem [shape: f32[4,10,16], index: 1, kind: input, shape index: {}]
  %s2 = inlined_call_operand.hbm [shape: f32[2,4,16,16], index: 2, kind: output, shape index: {}]
  %s3 = sld [smem:[#allocation0]]
  $region45: #{tpu_custom_call.1} parent=0
    _
  %s5 = ssub.s32 1, %s3
  %s6 = scalar_select 0, %s5, %s3
  $region1: #{tpu_custom_call.1} parent=0
    #allocation3 [shape = 'u8[65536]{0}', space=vmem, size = 0x10000, scoped, tag = 'input window, operand 0']
    #allocation4 [shape = 's32[2]{0}', space=sflag, size = 0x8, scoped, tag = 'scoped memory for tpu_custom_call.1']
    #allocation5 [shape = 's32[2]{0}', space=sflag, size = 0x8, scoped, tag = 'scoped memory for tpu_custom_call.1']
    #allocation6 [shape = 'u8[65536]{0}', space=vmem, size = 0x10000, scoped, tag = 'output window, operand 0']
    %7 = vsyncpa [#allocation4], 0
    %s8 = scalar_lea.sflag [#allocation4], 1
    %9 = vsyncpa %s8, 0
    %10 = vsyncpa [#allocation5], 0
    %s11 = scalar_lea.sflag [#allocation5], 1
    %12 = vsyncpa %s11, 0
    loop: start=0, step=1, limit=4
    $region2: #{tpu_custom_call.1} parent=1 // loop_pre_header
      _
    $region3: #{tpu_custom_call.1} parent=1 // loop_header
      %s14 = sphi 0, %s18
      %p15 = scmp.ge.s32.totalorder %s14, 4
      %s21 = sphi 0, %s33
      %s22 = sphi 0, %s29
      %s23 = sphi 0, %s21
      %s24 = sphi 0, %s22
      %s25 = sphi 0, %s23
      %s26 = sphi 0, %s24
      %s38 = sphi 0, %s40
      %s41 = sphi 0, %s38
      %s42 = sphi 0, %s41
      %s58 = sphi 0, %s42
      %s64 = sphi 0, %s66
      %s67 = sphi 0, %s64
      %s68 = sphi 0, %s67
      %s84 = sphi 0, %s68
      %s92 = sphi 0, %s94
      %s95 = sphi 0, %s92
      %s96 = sphi 0, %s95
      %s112 = sphi 0, %s96
    $region4: #{tpu_custom_call.1} parent=1 // loop_header_branch
      %17 = sbr.rel (%p15) target = $region8
    $region5: #{tpu_custom_call.1} parent=1 // loop_body
      %s19 = ssub.s32 %s14, 1
      %s20 = ssub.s32 %s14, 2
      %s27 = sadd.s32 1, %s22
      %p28 = scmp.ge.s32.totalorder %s27, 2
      %s29 = scalar_select %p28, 0, %s27
      %s30 = sadd.s32 1, %s21
      %s31 = scalar_select %p28, %s30, %s21
      %p32 = scmp.ge.s32.totalorder %s31, 1
      %s33 = scalar_select %p32, 0, %s31
      %s34 = ssub.s32 %s22, %s29
      %s35 = ssub.s32 %s21, %s33
      %s36 = sor.u32 %s34, %s35
      %p37 = scmp.eq.s32.totalorder %s36, 0
      %s39 = sadd.s32 %s38, 1
      %s40 = scalar_select %p37, %s38, %s39
      %p43 = pneg %p37
      %p44 = scmp.eq.s32.totalorder %s14, 1
      %p45 = por %p43, %p44
      %p46 = scmp.ne.s32.totalorder %s38, %s41
      %p47 = scmp.eq.s32.totalorder %s14, 0
      %p48 = por %p46, %p47
      %p49 = scmp.ne.s32.totalorder %s38, %s41
      %p50 = scmp.eq.s32.totalorder %s19, 1
      %p51 = por %p49, %p50
      %p52 = scmp.ne.s32.totalorder %s41, %s42
      %p53 = scmp.eq.s32.totalorder %s19, 0
      %p54 = por %p52, %p53
      %p55 = scmp.ne.s32.totalorder %s41, %s42
      %p56 = scmp.eq.s32.totalorder %s20, 1
      %p57 = por %p55, %p56
      %p59 = scmp.ne.s32.totalorder %s42, %s58
      %p60 = scmp.eq.s32.totalorder %s20, 0
      %p61 = por %p59, %p60
      %s62 = ssub.s32 %s21, %s33
      %p63 = scmp.eq.s32.totalorder %s62, 0
      %s65 = sadd.s32 %s64, 1
      %s66 = scalar_select %p63, %s64, %s65
      %p69 = pneg %p63
      %p70 = scmp.eq.s32.totalorder %s14, 1
      %p71 = por %p69, %p70
      %p72 = scmp.ne.s32.totalorder %s64, %s67
      %p73 = scmp.eq.s32.totalorder %s14, 0
      %p74 = por %p72, %p73
      %p75 = scmp.ne.s32.totalorder %s64, %s67
      %p76 = scmp.eq.s32.totalorder %s19, 1
      %p77 = por %p75, %p76
      %p78 = scmp.ne.s32.totalorder %s67, %s68
      %p79 = scmp.eq.s32.totalorder %s19, 0
      %p80 = por %p78, %p79
      %p81 = scmp.ne.s32.totalorder %s67, %s68
      %p82 = scmp.eq.s32.totalorder %s20, 1
      %p83 = por %p81, %p82
      %p85 = scmp.ne.s32.totalorder %s68, %s84
      %p86 = scmp.eq.s32.totalorder %s20, 0
      %p87 = por %p85, %p86
      %s88 = ssub.s32 %s22, %s29
      %s89 = ssub.s32 %s21, %s33
      %s90 = sor.u32 %s88, %s89
      %p91 = scmp.eq.s32.totalorder %s90, 0
      %s93 = sadd.s32 %s92, 1
      %s94 = scalar_select %p91, %s92, %s93
      %p97 = pneg %p91
      %p98 = scmp.eq.s32.totalorder %s14, 1
      %p99 = por %p97, %p98
      %p100 = scmp.ne.s32.totalorder %s92, %s95
      %p101 = scmp.eq.s32.totalorder %s14, 0
      %p102 = por %p100, %p101
      %p103 = scmp.ne.s32.totalorder %s92, %s95
      %p104 = scmp.eq.s32.totalorder %s19, 1
      %p105 = por %p103, %p104
      %p106 = scmp.ne.s32.totalorder %s95, %s96
      %p107 = scmp.eq.s32.totalorder %s19, 0
      %p108 = por %p106, %p107
      %p109 = scmp.ne.s32.totalorder %s95, %s96
      %p110 = scmp.eq.s32.totalorder %s20, 1
      %p111 = por %p109, %p110
      %p113 = scmp.ne.s32.totalorder %s96, %s112
      %p114 = scmp.eq.s32.totalorder %s20, 0
      %p115 = por %p113, %p114
      %p116 = scmp.le.s32.totalorder 1, %s14
      %p117 = scmp.lt.s32.totalorder %s14, 3
      %p118 = pnand %p116, %p117
      %p119 = pneg %p118
      // Predicated region
      $region9: #{tpu_custom_call.1} parent=5 // pred_check
        _
      $region10: #{tpu_custom_call.1} parent=5 // pred_check_branch
        %121 = sbr.rel (%p118) target = $region12
      $region11: #{tpu_custom_call.1} parent=5 // pred_region
        %s122 = ssub.s32 %s14, 1
        // Predicated region
        $region13: #{tpu_custom_call.1} parent=11 // pred_check
          %p123 = pneg %p80
        $region14: #{tpu_custom_call.1} parent=11 // pred_check_branch
          %125 = sbr.rel (%p123) target = $region16
        $region15: #{tpu_custom_call.1} parent=11 // pred_region
          %s126 = smul.u32 4, %s23
          %p127 = scmp.lt.s32.totalorder %s126, 3
          %s128 = scalar_select %p127, %s126, 3
          %s129 = smul.addr %s128, 2
          %s130 = smul.addr %s129, 8
          %s131 = scalar_lea.vmem %s1, %s130
          %s132 = smul.u32 4, %s23
        $region16: #{tpu_custom_call.1} parent=11 // pred_fallthru
          _
      $region12: #{tpu_custom_call.1} parent=5 // pred_fallthru
        _
      %p133 = scmp.lt.s32.totalorder %s14, 2
      // Predicated region
      $region17: #{tpu_custom_call.1} parent=5 // pred_check
        %p134 = pneg %p133
      $region18: #{tpu_custom_call.1} parent=5 // pred_check_branch
        %136 = sbr.rel (%p134) target = $region20
      $region19: #{tpu_custom_call.1} parent=5 // pred_region
        // Predicated region
        $region21: #{tpu_custom_call.1} parent=19 // pred_check
          %p137 = pneg %p48
        $region22: #{tpu_custom_call.1} parent=19 // pred_check_branch
          %139 = sbr.rel (%p137) target = $region24
        $region23: #{tpu_custom_call.1} parent=19 // pred_region
          %s140 = sand.u32 %s38, 1
          %s141 = scalar_lea.sflag [#allocation4], %s140
          %s142 = sand.u32 %s38, 1
          %s143 = smul.addr %s142, 64
          %s144 = scalar_lea.vmem [#allocation3], %s143
          %s145 = smul.u32 4, %s21
          %147 = vsyncadd %s141, 0
          %s148 = smul.addr %s145, 2
          %s149 = smul.addr %s22, 8
          %s150 = sadd.s32 %s148, %s149
          %s151 = smul.addr %s150, 8
          %s152 = scalar_lea.hbm %s0, %s151
          %s153 = sshll.u32 %s152, 4
          %s154 = int_to_ptr.hbm [resolvable:$true] %s153
          %s155 = sshll.u32 %s144, 4
          %s156 = int_to_ptr.vmem [resolvable:$true] %s155
          %161 = dma.hbm_to_vmem [thread:$0]  %s154, 1024, %s156, %s141, 128, 128, 8
        $region24: #{tpu_custom_call.1} parent=19 // pred_fallthru
          _
      $region20: #{tpu_custom_call.1} parent=5 // pred_fallthru
        _
      %p162 = scmp.le.s32.totalorder 1, %s14
      %p163 = scmp.lt.s32.totalorder %s14, 3
      %p164 = pnand %p162, %p163
      %p165 = pneg %p164
      // Predicated region
      $region25: #{tpu_custom_call.1} parent=5 // pred_check
        _
      $region26: #{tpu_custom_call.1} parent=5 // pred_check_branch
        %167 = sbr.rel (%p164) target = $region28
      $region27: #{tpu_custom_call.1} parent=5 // pred_region
        %s168 = ssub.s32 %s14, 1
        %s169 = sand.u32 %s41, 1
        %s170 = scalar_lea.sflag [#allocation4], %s169
        %s171 = sand.u32 %s41, 1
        %s172 = smul.addr %s171, 64
        %s173 = scalar_lea.vmem [#allocation3], %s172
        // Predicated region
        $region29: #{tpu_custom_call.1} parent=27 // pred_check
          %p174 = pneg %p54
        $region30: #{tpu_custom_call.1} parent=27 // pred_check_branch
          %176 = sbr.rel (%p174) target = $region32
        $region31: #{tpu_custom_call.1} parent=27 // pred_region
          %178 = dma.done %s170, 1024
        $region32: #{tpu_custom_call.1} parent=27 // pred_fallthru
          _
        %s179 = sand.u32 %s41, 1
        %s180 = scalar_lea.sflag [#allocation4], %s179
        %s181 = sand.u32 %s41, 1
        %s182 = smul.addr %s181, 64
        %s183 = scalar_lea.vmem [#allocation3], %s182
        %p184 = pneg %p54
        %p185 = pneg %p51
        %s186 = smul.u32 4, %s23
        %p187 = scmp.lt.s32.totalorder %s186, 3
        %s188 = scalar_select %p187, %s186, 3
        %s189 = smul.addr %s188, 2
        %s190 = smul.addr %s189, 8
        %s191 = scalar_lea.vmem %s1, %s190
        %p192 = pneg %p80
        %p193 = pneg %p77
        %p194 = pneg %p108
        %p195 = pneg %p105
        %s196 = sand.u32 %s95, 1
        %s197 = scalar_lea.sflag [#allocation5], %s196
        %s198 = sand.u32 %s95, 1
        %s199 = smul.addr %s198, 64
        %s200 = scalar_lea.vmem [#allocation6], %s199
        %s201 = smul.u32 4, %s23
        %s202 = smul.u32 4, %s23
        %p203 = scmp.lt.s32.totalorder %s202, 3
        %s204 = scalar_select %p203, %s202, 3
        %s205 = smul.addr %s204, 2
        %s206 = smul.addr %s205, 8
        %s207 = scalar_lea.vmem %s1, %s206
        %s208 = smul.u32 4, %s23
        %s209 = smul.u32 4, %s23
        %vm210 = vcmask 139264
        %211 = vst.msk [vmem:[#allocation2] sm:$0x1] %vm210, 0.0
        %212 = vst.msk [vmem:[#allocation2 + $0x18] sm:$0x1] %vm210, 0.0
        %213 = vst.msk [vmem:[#allocation2 + $0x30] sm:$0x1] %vm210, 0.0
        %214 = vst.msk [vmem:[#allocation2 + $0x48] sm:$0x1] %vm210, 0.0
        %215 = vst.msk [vmem:[#allocation2 + $0x11] sm:$0x1] %vm210, 0.0
        %216 = vst.msk [vmem:[#allocation2 + $0x29] sm:$0x1] %vm210, 0.0
        %217 = vst.msk [vmem:[#allocation2 + $0x41] sm:$0x1] %vm210, 0.0
        %218 = vst.msk [vmem:[#allocation2 + $0x59] sm:$0x1] %vm210, 0.0
        %vm219 = vcmask 7168
        %220 = vst.msk [vmem:[#allocation2 + $0x1] sm:$0xff] %vm219, 0.0
        %221 = vst.msk [vmem:[#allocation2 + $0x9] sm:$0xff] %vm219, 0.0
        %222 = vst.msk [vmem:[#allocation2 + $0x19] sm:$0xff] %vm219, 0.0
        %223 = vst.msk [vmem:[#allocation2 + $0x21] sm:$0xff] %vm219, 0.0
        %224 = vst.msk [vmem:[#allocation2 + $0x31] sm:$0xff] %vm219, 0.0
        %225 = vst.msk [vmem:[#allocation2 + $0x39] sm:$0xff] %vm219, 0.0
        %226 = vst.msk [vmem:[#allocation2 + $0x49] sm:$0xff] %vm219, 0.0
        %227 = vst.msk [vmem:[#allocation2 + $0x51] sm:$0xff] %vm219, 0.0
        %vm228 = vcmask 146568
        %229 = vst.msk [vmem:[#allocation2 + $0x1] sm:$0xff] %vm228, 0.0
        %230 = vst.msk [vmem:[#allocation2 + $0x9] sm:$0xff] %vm228, 0.0
        %231 = vst.msk [vmem:[#allocation2 + $0x19] sm:$0xff] %vm228, 0.0
        %232 = vst.msk [vmem:[#allocation2 + $0x21] sm:$0xff] %vm228, 0.0
        %233 = vst.msk [vmem:[#allocation2 + $0x31] sm:$0xff] %vm228, 0.0
        %234 = vst.msk [vmem:[#allocation2 + $0x39] sm:$0xff] %vm228, 0.0
        %235 = vst.msk [vmem:[#allocation2 + $0x49] sm:$0xff] %vm228, 0.0
        %236 = vst.msk [vmem:[#allocation2 + $0x51] sm:$0xff] %vm228, 0.0
        %v237 = vld [vmem:[%s173] sm:$0xff]
        %v238 = vld [vmem:[%s173 + $0x8] sm:$0xff]
        %v239 = vld [vmem:[%s173 + $0x10] sm:$0xff]
        %v240 = vld [vmem:[%s173 + $0x18] sm:$0xff]
        %v241 = vld [vmem:[%s173 + $0x20] sm:$0xff]
        %v242 = vld [vmem:[%s173 + $0x28] sm:$0xff]
        %v243 = vld [vmem:[%s173 + $0x30] sm:$0xff]
        %v244 = vld [vmem:[%s173 + $0x38] sm:$0xff]
        %253 = vrot.lane.b32.xlu0 %v237, 1
        %v254 = vpop.permute.xlu0 %253
        %255 = vrot.lane.b32.xlu0 %v238, 1
        %v256 = vpop.permute.xlu0 %255
        %257 = vrot.lane.b32.xlu0 %v239, 1
        %v258 = vpop.permute.xlu0 %257
        %259 = vrot.lane.b32.xlu0 %v240, 1
        %v260 = vpop.permute.xlu0 %259
        %261 = vrot.lane.b32.xlu0 %v241, 1
        %v262 = vpop.permute.xlu0 %261
        %263 = vrot.lane.b32.xlu0 %v242, 1
        %v264 = vpop.permute.xlu0 %263
        %265 = vrot.lane.b32.xlu0 %v243, 1
        %v266 = vpop.permute.xlu0 %265
        %267 = vrot.lane.b32.xlu0 %v244, 1
        %v268 = vpop.permute.xlu0 %267
        %vm277 = vcmask 138248
        %278 = vst.msk [vmem:[#allocation2 + $0x1] sm:$0xff] %vm277, %v254
        %279 = vst.msk [vmem:[#allocation2 + $0x9] sm:$0xff] %vm277, %v256
        %280 = vst.msk [vmem:[#allocation2 + $0x19] sm:$0xff] %vm277, %v258
        %281 = vst.msk [vmem:[#allocation2 + $0x21] sm:$0xff] %vm277, %v260
        %282 = vst.msk [vmem:[#allocation2 + $0x31] sm:$0xff] %vm277, %v262
        %283 = vst.msk [vmem:[#allocation2 + $0x39] sm:$0xff] %vm277, %v264
        %284 = vst.msk [vmem:[#allocation2 + $0x49] sm:$0xff] %vm277, %v266
        %285 = vst.msk [vmem:[#allocation2 + $0x51] sm:$0xff] %vm277, %v268
        %v286 = vld [vmem:[%s207 + $0x9] sm:$0x1]
        %v287 = vld [vmem:[%s207 + $0x19] sm:$0x1]
        %v288 = vld [vmem:[%s207 + $0x29] sm:$0x1]
        %v289 = vld [vmem:[%s207 + $0x39] sm:$0x1]
        %v290 = vperm.slane %v286, 0
        %v291 = vperm.slane %v287, 0
        %v292 = vperm.slane %v288, 0
        %v293 = vperm.slane %v289, 0
        %v294 = vld [vmem:[#allocation2] sm:$0xff]
        %v295 = vld [vmem:[#allocation2 + $0x8] sm:$0xff]
        %v296 = vld [vmem:[#allocation2 + $0x18] sm:$0xff]
        %v297 = vld [vmem:[#allocation2 + $0x20] sm:$0xff]
        %v298 = vld [vmem:[#allocation2 + $0x30] sm:$0xff]
        %v299 = vld [vmem:[#allocation2 + $0x38] sm:$0xff]
        %v300 = vld [vmem:[#allocation2 + $0x48] sm:$0xff]
        %v301 = vld [vmem:[#allocation2 + $0x50] sm:$0xff]
        %v302 = vld [vmem:[%s207] sm:$0x1]
        %v303 = vld [vmem:[%s207 + $0x10] sm:$0x1]
        %v304 = vld [vmem:[%s207 + $0x20] sm:$0x1]
        %v305 = vld [vmem:[%s207 + $0x30] sm:$0x1]
        %v306 = vperm.slane %v302, 0
        %v307 = vperm.slane %v303, 0
        %v308 = vperm.slane %v304, 0
        %v309 = vperm.slane %v305, 0
        %v310 = vmul.f32 %v294, %v306
        %v311 = vmul.f32 %v295, %v306
        %v312 = vmul.f32 %v296, %v307
        %v313 = vmul.f32 %v297, %v307
        %v314 = vmul.f32 %v298, %v308
        %v315 = vmul.f32 %v299, %v308
        %v316 = vmul.f32 %v300, %v309
        %v317 = vmul.f32 %v301, %v309
        %v318 = vadd.f32 %v290, %v310
        %v319 = vadd.f32 %v290, %v311
        %v320 = vadd.f32 %v291, %v312
        %v321 = vadd.f32 %v291, %v313
        %v322 = vadd.f32 %v292, %v314
        %v323 = vadd.f32 %v292, %v315
        %v324 = vadd.f32 %v293, %v316
        %v325 = vadd.f32 %v293, %v317
        %v326 = vld [vmem:[%s207 + $0x1] sm:$0x1]
        %v327 = vld [vmem:[%s207 + $0x11] sm:$0x1]
        %v328 = vld [vmem:[%s207 + $0x21] sm:$0x1]
        %v329 = vld [vmem:[%s207 + $0x31] sm:$0x1]
        %v330 = vperm.slane %v326, 0
        %v331 = vperm.slane %v327, 0
        %v332 = vperm.slane %v328, 0
        %v333 = vperm.slane %v329, 0
        %338 = vrot.lane.b32.xlu0 %v330, 1
        %v339 = vpop.permute.xlu0 %338
        %340 = vrot.lane.b32.xlu0 %v331, 1
        %v341 = vpop.permute.xlu0 %340
        %342 = vrot.lane.b32.xlu0 %v332, 1
        %v343 = vpop.permute.xlu0 %342
        %344 = vrot.lane.b32.xlu0 %v333, 1
        %v345 = vpop.permute.xlu0 %344
        %v350 = vmul.f32 %v294, %v339
        %v351 = vmul.f32 %v295, %v339
        %v352 = vmul.f32 %v296, %v341
        %v353 = vmul.f32 %v297, %v341
        %v354 = vmul.f32 %v298, %v343
        %v355 = vmul.f32 %v299, %v343
        %v356 = vmul.f32 %v300, %v345
        %v357 = vmul.f32 %v301, %v345
        %366 = vrot.lane.b32.xlu0 %v350, 127
        %v367 = vpop.permute.xlu0 %366
        %368 = vrot.lane.b32.xlu0 %v351, 127
        %v369 = vpop.permute.xlu0 %368
        %370 = vrot.lane.b32.xlu0 %v352, 127
        %v371 = vpop.permute.xlu0 %370
        %372 = vrot.lane.b32.xlu0 %v353, 127
        %v373 = vpop.permute.xlu0 %372
        %374 = vrot.lane.b32.xlu0 %v354, 127
        %v375 = vpop.permute.xlu0 %374
        %376 = vrot.lane.b32.xlu0 %v355, 127
        %v377 = vpop.permute.xlu0 %376
        %378 = vrot.lane.b32.xlu0 %v356, 127
        %v379 = vpop.permute.xlu0 %378
        %380 = vrot.lane.b32.xlu0 %v357, 127
        %v381 = vpop.permute.xlu0 %380
        %v390 = vadd.f32 %v318, %v367
        %v391 = vadd.f32 %v319, %v369
        %v392 = vadd.f32 %v320, %v371
        %v393 = vadd.f32 %v321, %v373
        %v394 = vadd.f32 %v322, %v375
        %v395 = vadd.f32 %v323, %v377
        %v396 = vadd.f32 %v324, %v379
        %v397 = vadd.f32 %v325, %v381
        %v398 = vld [vmem:[%s207 + $0x2] sm:$0x1]
        %v399 = vld [vmem:[%s207 + $0x12] sm:$0x1]
        %v400 = vld [vmem:[%s207 + $0x22] sm:$0x1]
        %v401 = vld [vmem:[%s207 + $0x32] sm:$0x1]
        %v402 = vperm.slane %v398, 0
        %v403 = vperm.slane %v399, 0
        %v404 = vperm.slane %v400, 0
        %v405 = vperm.slane %v401, 0
        %410 = vrot.lane.b32.xlu0 %v402, 2
        %v411 = vpop.permute.xlu0 %410
        %412 = vrot.lane.b32.xlu0 %v403, 2
        %v413 = vpop.permute.xlu0 %412
        %414 = vrot.lane.b32.xlu0 %v404, 2
        %v415 = vpop.permute.xlu0 %414
        %416 = vrot.lane.b32.xlu0 %v405, 2
        %v417 = vpop.permute.xlu0 %416
        %v422 = vmul.f32 %v294, %v411
        %v423 = vmul.f32 %v295, %v411
        %v424 = vmul.f32 %v296, %v413
        %v425 = vmul.f32 %v297, %v413
        %v426 = vmul.f32 %v298, %v415
        %v427 = vmul.f32 %v299, %v415
        %v428 = vmul.f32 %v300, %v417
        %v429 = vmul.f32 %v301, %v417
        %438 = vrot.lane.b32.xlu0 %v422, 126
        %v439 = vpop.permute.xlu0 %438
        %440 = vrot.lane.b32.xlu0 %v423, 126
        %v441 = vpop.permute.xlu0 %440
        %442 = vrot.lane.b32.xlu0 %v424, 126
        %v443 = vpop.permute.xlu0 %442
        %444 = vrot.lane.b32.xlu0 %v425, 126
        %v445 = vpop.permute.xlu0 %444
        %446 = vrot.lane.b32.xlu0 %v426, 126
        %v447 = vpop.permute.xlu0 %446
        %448 = vrot.lane.b32.xlu0 %v427, 126
        %v449 = vpop.permute.xlu0 %448
        %450 = vrot.lane.b32.xlu0 %v428, 126
        %v451 = vpop.permute.xlu0 %450
        %452 = vrot.lane.b32.xlu0 %v429, 126
        %v453 = vpop.permute.xlu0 %452
        %v462 = vadd.f32 %v390, %v439
        %v463 = vadd.f32 %v391, %v441
        %v464 = vadd.f32 %v392, %v443
        %v465 = vadd.f32 %v393, %v445
        %v466 = vadd.f32 %v394, %v447
        %v467 = vadd.f32 %v395, %v449
        %v468 = vadd.f32 %v396, %v451
        %v469 = vadd.f32 %v397, %v453
        %v470 = vld [vmem:[#allocation2 + $0x1] sm:$0xff]
        %v471 = vld [vmem:[#allocation2 + $0x9] sm:$0xff]
        %v472 = vld [vmem:[#allocation2 + $0x19] sm:$0xff]
        %v473 = vld [vmem:[#allocation2 + $0x21] sm:$0xff]
        %v474 = vld [vmem:[#allocation2 + $0x31] sm:$0xff]
        %v475 = vld [vmem:[#allocation2 + $0x39] sm:$0xff]
        %v476 = vld [vmem:[#allocation2 + $0x49] sm:$0xff]
        %v477 = vld [vmem:[#allocation2 + $0x51] sm:$0xff]
        %v478 = vld [vmem:[%s207 + $0x3] sm:$0x1]
        %v479 = vld [vmem:[%s207 + $0x13] sm:$0x1]
        %v480 = vld [vmem:[%s207 + $0x23] sm:$0x1]
        %v481 = vld [vmem:[%s207 + $0x33] sm:$0x1]
        %v482 = vperm.slane %v478, 0
        %v483 = vperm.slane %v479, 0
        %v484 = vperm.slane %v480, 0
        %v485 = vperm.slane %v481, 0
        %v486 = vmul.f32 %v470, %v482
        %v487 = vmul.f32 %v471, %v482
        %v488 = vmul.f32 %v472, %v483
        %v489 = vmul.f32 %v473, %v483
        %v490 = vmul.f32 %v474, %v484
        %v491 = vmul.f32 %v475, %v484
        %v492 = vmul.f32 %v476, %v485
        %v493 = vmul.f32 %v477, %v485
        %v494 = vadd.f32 %v462, %v486
        %v495 = vadd.f32 %v463, %v487
        %v496 = vadd.f32 %v464, %v488
        %v497 = vadd.f32 %v465, %v489
        %v498 = vadd.f32 %v466, %v490
        %v499 = vadd.f32 %v467, %v491
        %v500 = vadd.f32 %v468, %v492
        %v501 = vadd.f32 %v469, %v493
        %v502 = vld [vmem:[%s207 + $0x4] sm:$0x1]
        %v503 = vld [vmem:[%s207 + $0x14] sm:$0x1]
        %v504 = vld [vmem:[%s207 + $0x24] sm:$0x1]
        %v505 = vld [vmem:[%s207 + $0x34] sm:$0x1]
        %v506 = vperm.slane %v502, 0
        %v507 = vperm.slane %v503, 0
        %v508 = vperm.slane %v504, 0
        %v509 = vperm.slane %v505, 0
        %514 = vrot.lane.b32.xlu0 %v506, 1
        %v515 = vpop.permute.xlu0 %514
        %516 = vrot.lane.b32.xlu0 %v507, 1
        %v517 = vpop.permute.xlu0 %516
        %518 = vrot.lane.b32.xlu0 %v508, 1
        %v519 = vpop.permute.xlu0 %518
        %520 = vrot.lane.b32.xlu0 %v509, 1
        %v521 = vpop.permute.xlu0 %520
        %v526 = vmul.f32 %v470, %v515
        %v527 = vmul.f32 %v471, %v515
        %v528 = vmul.f32 %v472, %v517
        %v529 = vmul.f32 %v473, %v517
        %v530 = vmul.f32 %v474, %v519
        %v531 = vmul.f32 %v475, %v519
        %v532 = vmul.f32 %v476, %v521
        %v533 = vmul.f32 %v477, %v521
        %542 = vrot.lane.b32.xlu0 %v526, 127
        %v543 = vpop.permute.xlu0 %542
        %544 = vrot.lane.b32.xlu0 %v527, 127
        %v545 = vpop.permute.xlu0 %544
        %546 = vrot.lane.b32.xlu0 %v528, 127
        %v547 = vpop.permute.xlu0 %546
        %548 = vrot.lane.b32.xlu0 %v529, 127
        %v549 = vpop.permute.xlu0 %548
        %550 = vrot.lane.b32.xlu0 %v530, 127
        %v551 = vpop.permute.xlu0 %550
        %552 = vrot.lane.b32.xlu0 %v531, 127
        %v553 = vpop.permute.xlu0 %552
        %554 = vrot.lane.b32.xlu0 %v532, 127
        %v555 = vpop.permute.xlu0 %554
        %556 = vrot.lane.b32.xlu0 %v533, 127
        %v557 = vpop.permute.xlu0 %556
        %v566 = vadd.f32 %v494, %v543
        %v567 = vadd.f32 %v495, %v545
        %v568 = vadd.f32 %v496, %v547
        %v569 = vadd.f32 %v497, %v549
        %v570 = vadd.f32 %v498, %v551
        %v571 = vadd.f32 %v499, %v553
        %v572 = vadd.f32 %v500, %v555
        %v573 = vadd.f32 %v501, %v557
        %v574 = vld [vmem:[%s207 + $0x5] sm:$0x1]
        %v575 = vld [vmem:[%s207 + $0x15] sm:$0x1]
        %v576 = vld [vmem:[%s207 + $0x25] sm:$0x1]
        %v577 = vld [vmem:[%s207 + $0x35] sm:$0x1]
        %v578 = vperm.slane %v574, 0
        %v579 = vperm.slane %v575, 0
        %v580 = vperm.slane %v576, 0
        %v581 = vperm.slane %v577, 0
        %586 = vrot.lane.b32.xlu0 %v578, 2
        %v587 = vpop.permute.xlu0 %586
        %588 = vrot.lane.b32.xlu0 %v579, 2
        %v589 = vpop.permute.xlu0 %588
        %590 = vrot.lane.b32.xlu0 %v580, 2
        %v591 = vpop.permute.xlu0 %590
        %592 = vrot.lane.b32.xlu0 %v581, 2
        %v593 = vpop.permute.xlu0 %592
        %v598 = vmul.f32 %v470, %v587
        %v599 = vmul.f32 %v471, %v587
        %v600 = vmul.f32 %v472, %v589
        %v601 = vmul.f32 %v473, %v589
        %v602 = vmul.f32 %v474, %v591
        %v603 = vmul.f32 %v475, %v591
        %v604 = vmul.f32 %v476, %v593
        %v605 = vmul.f32 %v477, %v593
        %614 = vrot.lane.b32.xlu0 %v598, 126
        %v615 = vpop.permute.xlu0 %614
        %616 = vrot.lane.b32.xlu0 %v599, 126
        %v617 = vpop.permute.xlu0 %616
        %618 = vrot.lane.b32.xlu0 %v600, 126
        %v619 = vpop.permute.xlu0 %618
        %620 = vrot.lane.b32.xlu0 %v601, 126
        %v621 = vpop.permute.xlu0 %620
        %622 = vrot.lane.b32.xlu0 %v602, 126
        %v623 = vpop.permute.xlu0 %622
        %624 = vrot.lane.b32.xlu0 %v603, 126
        %v625 = vpop.permute.xlu0 %624
        %626 = vrot.lane.b32.xlu0 %v604, 126
        %v627 = vpop.permute.xlu0 %626
        %628 = vrot.lane.b32.xlu0 %v605, 126
        %v629 = vpop.permute.xlu0 %628
        %v638 = vadd.f32 %v566, %v615
        %v639 = vadd.f32 %v567, %v617
        %v640 = vadd.f32 %v568, %v619
        %v641 = vadd.f32 %v569, %v621
        %v642 = vadd.f32 %v570, %v623
        %v643 = vadd.f32 %v571, %v625
        %v644 = vadd.f32 %v572, %v627
        %v645 = vadd.f32 %v573, %v629
        %v646 = vld [vmem:[#allocation2 + $0x2] sm:$0xff]
        %v647 = vld [vmem:[#allocation2 + $0xa] sm:$0xff]
        %v648 = vld [vmem:[#allocation2 + $0x1a] sm:$0xff]
        %v649 = vld [vmem:[#allocation2 + $0x22] sm:$0xff]
        %v650 = vld [vmem:[#allocation2 + $0x32] sm:$0xff]
        %v651 = vld [vmem:[#allocation2 + $0x3a] sm:$0xff]
        %v652 = vld [vmem:[#allocation2 + $0x4a] sm:$0xff]
        %v653 = vld [vmem:[#allocation2 + $0x52] sm:$0xff]
        %v654 = vld [vmem:[%s207 + $0x6] sm:$0x1]
        %v655 = vld [vmem:[%s207 + $0x16] sm:$0x1]
        %v656 = vld [vmem:[%s207 + $0x26] sm:$0x1]
        %v657 = vld [vmem:[%s207 + $0x36] sm:$0x1]
        %v658 = vperm.slane %v654, 0
        %v659 = vperm.slane %v655, 0
        %v660 = vperm.slane %v656, 0
        %v661 = vperm.slane %v657, 0
        %v662 = vmul.f32 %v646, %v658
        %v663 = vmul.f32 %v647, %v658
        %v664 = vmul.f32 %v648, %v659
        %v665 = vmul.f32 %v649, %v659
        %v666 = vmul.f32 %v650, %v660
        %v667 = vmul.f32 %v651, %v660
        %v668 = vmul.f32 %v652, %v661
        %v669 = vmul.f32 %v653, %v661
        %v670 = vadd.f32 %v638, %v662
        %v671 = vadd.f32 %v639, %v663
        %v672 = vadd.f32 %v640, %v664
        %v673 = vadd.f32 %v641, %v665
        %v674 = vadd.f32 %v642, %v666
        %v675 = vadd.f32 %v643, %v667
        %v676 = vadd.f32 %v644, %v668
        %v677 = vadd.f32 %v645, %v669
        %v678 = vld [vmem:[%s207 + $0x7] sm:$0x1]
        %v679 = vld [vmem:[%s207 + $0x17] sm:$0x1]
        %v680 = vld [vmem:[%s207 + $0x27] sm:$0x1]
        %v681 = vld [vmem:[%s207 + $0x37] sm:$0x1]
        %v682 = vperm.slane %v678, 0
        %v683 = vperm.slane %v679, 0
        %v684 = vperm.slane %v680, 0
        %v685 = vperm.slane %v681, 0
        %690 = vrot.lane.b32.xlu0 %v682, 1
        %v691 = vpop.permute.xlu0 %690
        %692 = vrot.lane.b32.xlu0 %v683, 1
        %v693 = vpop.permute.xlu0 %692
        %694 = vrot.lane.b32.xlu0 %v684, 1
        %v695 = vpop.permute.xlu0 %694
        %696 = vrot.lane.b32.xlu0 %v685, 1
        %v697 = vpop.permute.xlu0 %696
        %v702 = vmul.f32 %v646, %v691
        %v703 = vmul.f32 %v647, %v691
        %v704 = vmul.f32 %v648, %v693
        %v705 = vmul.f32 %v649, %v693
        %v706 = vmul.f32 %v650, %v695
        %v707 = vmul.f32 %v651, %v695
        %v708 = vmul.f32 %v652, %v697
        %v709 = vmul.f32 %v653, %v697
        %718 = vrot.lane.b32.xlu0 %v702, 127
        %v719 = vpop.permute.xlu0 %718
        %720 = vrot.lane.b32.xlu0 %v703, 127
        %v721 = vpop.permute.xlu0 %720
        %722 = vrot.lane.b32.xlu0 %v704, 127
        %v723 = vpop.permute.xlu0 %722
        %724 = vrot.lane.b32.xlu0 %v705, 127
        %v725 = vpop.permute.xlu0 %724
        %726 = vrot.lane.b32.xlu0 %v706, 127
        %v727 = vpop.permute.xlu0 %726
        %728 = vrot.lane.b32.xlu0 %v707, 127
        %v729 = vpop.permute.xlu0 %728
        %730 = vrot.lane.b32.xlu0 %v708, 127
        %v731 = vpop.permute.xlu0 %730
        %732 = vrot.lane.b32.xlu0 %v709, 127
        %v733 = vpop.permute.xlu0 %732
        %v742 = vadd.f32 %v670, %v719
        %v743 = vadd.f32 %v671, %v721
        %v744 = vadd.f32 %v672, %v723
        %v745 = vadd.f32 %v673, %v725
        %v746 = vadd.f32 %v674, %v727
        %v747 = vadd.f32 %v675, %v729
        %v748 = vadd.f32 %v676, %v731
        %v749 = vadd.f32 %v677, %v733
        %v750 = vld [vmem:[%s207 + $0x8] sm:$0x1]
        %v751 = vld [vmem:[%s207 + $0x18] sm:$0x1]
        %v752 = vld [vmem:[%s207 + $0x28] sm:$0x1]
        %v753 = vld [vmem:[%s207 + $0x38] sm:$0x1]
        %v754 = vperm.slane %v750, 0
        %v755 = vperm.slane %v751, 0
        %v756 = vperm.slane %v752, 0
        %v757 = vperm.slane %v753, 0
        %762 = vrot.lane.b32.xlu0 %v754, 2
        %v763 = vpop.permute.xlu0 %762
        %764 = vrot.lane.b32.xlu0 %v755, 2
        %v765 = vpop.permute.xlu0 %764
        %766 = vrot.lane.b32.xlu0 %v756, 2
        %v767 = vpop.permute.xlu0 %766
        %768 = vrot.lane.b32.xlu0 %v757, 2
        %v769 = vpop.permute.xlu0 %768
        %v774 = vmul.f32 %v646, %v763
        %v775 = vmul.f32 %v647, %v763
        %v776 = vmul.f32 %v648, %v765
        %v777 = vmul.f32 %v649, %v765
        %v778 = vmul.f32 %v650, %v767
        %v779 = vmul.f32 %v651, %v767
        %v780 = vmul.f32 %v652, %v769
        %v781 = vmul.f32 %v653, %v769
        %790 = vrot.lane.b32.xlu0 %v774, 126
        %v791 = vpop.permute.xlu0 %790
        %792 = vrot.lane.b32.xlu0 %v775, 126
        %v793 = vpop.permute.xlu0 %792
        %794 = vrot.lane.b32.xlu0 %v776, 126
        %v795 = vpop.permute.xlu0 %794
        %796 = vrot.lane.b32.xlu0 %v777, 126
        %v797 = vpop.permute.xlu0 %796
        %798 = vrot.lane.b32.xlu0 %v778, 126
        %v799 = vpop.permute.xlu0 %798
        %800 = vrot.lane.b32.xlu0 %v779, 126
        %v801 = vpop.permute.xlu0 %800
        %802 = vrot.lane.b32.xlu0 %v780, 126
        %v803 = vpop.permute.xlu0 %802
        %804 = vrot.lane.b32.xlu0 %v781, 126
        %v805 = vpop.permute.xlu0 %804
        %v814 = vadd.f32 %v742, %v791
        %v815 = vadd.f32 %v743, %v793
        %v816 = vadd.f32 %v744, %v795
        %v817 = vadd.f32 %v745, %v797
        %v818 = vadd.f32 %v746, %v799
        %v819 = vadd.f32 %v747, %v801
        %v820 = vadd.f32 %v748, %v803
        %v821 = vadd.f32 %v749, %v805
        %vm822 = vcmask 130048
        %823 = vst.msk [vmem:[%s200] sm:$0xff] %vm822, %v814
        %824 = vst.msk [vmem:[%s200 + $0x8] sm:$0xff] %vm822, %v815
        %825 = vst.msk [vmem:[%s200 + $0x10] sm:$0xff] %vm822, %v816
        %826 = vst.msk [vmem:[%s200 + $0x18] sm:$0xff] %vm822, %v817
        %827 = vst.msk [vmem:[%s200 + $0x20] sm:$0xff] %vm822, %v818
        %828 = vst.msk [vmem:[%s200 + $0x28] sm:$0xff] %vm822, %v819
        %829 = vst.msk [vmem:[%s200 + $0x30] sm:$0xff] %vm822, %v820
        %830 = vst.msk [vmem:[%s200 + $0x38] sm:$0xff] %vm822, %v821
        %s831 = sand.u32 %s95, 1
        %s832 = scalar_lea.sflag [#allocation5], %s831
        %s833 = sand.u32 %s95, 1
        %s834 = smul.addr %s833, 64
        %s835 = scalar_lea.vmem [#allocation6], %s834
        // Predicated region
        $region33: #{tpu_custom_call.1} parent=27 // pred_check
          %p836 = pneg %p105
        $region34: #{tpu_custom_call.1} parent=27 // pred_check_branch
          %838 = sbr.rel (%p836) target = $region36
        $region35: #{tpu_custom_call.1} parent=27 // pred_region
          %s839 = smul.u32 4, %s23
          %841 = vsyncadd %s832, 0
          %s842 = smul.addr %s839, 2
          %s843 = smul.addr %s24, 8
          %s844 = sadd.s32 %s842, %s843
          %s845 = smul.addr %s844, 8
          %s846 = scalar_lea.hbm %s2, %s845
          %s847 = sshll.u32 %s835, 4
          %s848 = int_to_ptr.vmem [resolvable:$true] %s847
          %s849 = sshll.u32 %s846, 4
          %s850 = int_to_ptr.hbm [resolvable:$true] %s849
          %855 = dma.vmem_to_hbm [thread:$0]  %s848, 1024, %s850, %s832, 128, 128, 8
        $region36: #{tpu_custom_call.1} parent=27 // pred_fallthru
          _
      $region28: #{tpu_custom_call.1} parent=5 // pred_fallthru
        _
      %p856 = scmp.le.s32.totalorder 2, %s14
      // Predicated region
      $region37: #{tpu_custom_call.1} parent=5 // pred_check
        %p857 = pneg %p856
      $region38: #{tpu_custom_call.1} parent=5 // pred_check_branch
        %859 = sbr.rel (%p857) target = $region40
      $region39: #{tpu_custom_call.1} parent=5 // pred_region
        %s860 = ssub.s32 %s14, 2
        // Predicated region
        $region41: #{tpu_custom_call.1} parent=39 // pred_check
          %p861 = pneg %p111
        $region42: #{tpu_custom_call.1} parent=39 // pred_check_branch
          %863 = sbr.rel (%p861) target = $region44
        $region43: #{tpu_custom_call.1} parent=39 // pred_region
          %s864 = sand.u32 %s96, 1
          %s865 = scalar_lea.sflag [#allocation5], %s864
          %s866 = sand.u32 %s96, 1
          %s867 = smul.addr %s866, 64
          %s868 = scalar_lea.vmem [#allocation6], %s867
          %870 = dma.done %s865, 1024
        $region44: #{tpu_custom_call.1} parent=39 // pred_fallthru
          _
      $region40: #{tpu_custom_call.1} parent=5 // pred_fallthru
        _
    $region6: #{tpu_custom_call.1} parent=1 // loop_footer
      %s18 = sadd.s32 1, %s14
    $region7: #{tpu_custom_call.1} parent=1 // loop_footer_branch
      %13 = sbr.rel target = $region3
    $region8: #{tpu_custom_call.1} parent=1 // loop_exit
      _
    %871 = vsyncpa [#allocation4], 1
    %s872 = scalar_lea.sflag [#allocation4], 1
    %873 = vsyncpa %s872, 1
    %874 = vsyncpa [#allocation5], 1
    %s875 = scalar_lea.sflag [#allocation5], 1
    %876 = vsyncpa %s875, 1

</llo_original>
